<compile_context>
chip_gen: v6e
topology: v6e:2x2x1
jax: 0.10.0
libtpu: 0.0.40
codegen_flags: <defaults>
</compile_context>

<pallas_src>
import jax
import jax.numpy as jnp
from jax.experimental import pallas as pl
from jax.experimental.pallas import tpu as pltpu


def _mlp_kernel(x_ref, w1_ref, b1_ref, w2_ref, b2_ref, w3_ref, b3_ref, o_ref):
    # Fused hot path: 3 bf16 MXU matmuls with f32 accumulation, f32 bias adds,
    # ReLU and sigmoid, all resident in VMEM.  x is cast to bf16 here (VPU
    # work hidden under the DMA) instead of materializing a bf16 copy in HBM.
    x = x_ref[...].astype(jnp.bfloat16)                              # [tb, 504]
    h1 = jnp.dot(x, w1_ref[...], preferred_element_type=jnp.float32) + b1_ref[...]
    h1 = jnp.maximum(h1, 0.0)                                        # ReLU (dropout = identity, eval)
    h2 = jnp.dot(h1.astype(jnp.bfloat16), w2_ref[...],
                 preferred_element_type=jnp.float32) + b2_ref[...]
    h2 = jnp.maximum(h2, 0.0)                                        # ReLU (dropout = identity, eval)
    z = jnp.dot(h2.astype(jnp.bfloat16), w3_ref[...],
                preferred_element_type=jnp.float32) + b3_ref[...]
    o_ref[...] = jax.nn.sigmoid(z).astype(o_ref.dtype)


def _round_up(n, m):
    return ((n + m - 1) // m) * m


def prepare_params(w1, b1, w2, b2, w3, b3):
    """One-time weight prep (call at model init, NOT per forward):
    bf16 matmul operands, f32 row-vector biases. Weights stored [fan_in, fan_out]."""
    bf16, f32 = jnp.bfloat16, jnp.float32
    return (w1.astype(bf16), jnp.reshape(b1, (1, -1)).astype(f32),
            w2.astype(bf16), jnp.reshape(b2, (1, -1)).astype(f32),
            w3.astype(bf16), jnp.reshape(b3, (1, -1)).astype(f32))


def splice_site_mlp(x, params, *, block_b=None, out_dtype=jnp.float32):
    """x: [B, 504] f32 (unpadded). params: output of prepare_params()."""
    w1, b1, w2, b2, w3, b3 = params
    B, D_in = x.shape
    H1 = w1.shape[1]
    H2 = w2.shape[1]
    D_out = w3.shape[1]
    assert w1.shape == (D_in, H1) and w2.shape == (H1, H2) and w3.shape == (H2, D_out)

    # Batch tiling. Uneven tails are handled by the grid (masked edge stores),
    # so no batch padding and no post-kernel slice.
    if block_b is None:
        if B <= 256:
            block_b = B                              # one tile; block == full dim is always legal
        elif B <= 2048:
            block_b = _round_up(pl.cdiv(B, 2), 16)   # >= 2 grid steps -> v7x dual-TC sharding
        else:
            block_b = 1024                           # ~11 MiB live VMEM; fits v5e 16 MiB scoped default
    assert block_b == B or block_b % 8 == 0
    grid = (pl.cdiv(B, block_b),)

    cost = pl.CostEstimate(
        flops=2 * B * (D_in * H1 + H1 * H2 + H2 * D_out),
        transcendentals=B * D_out,                   # sigmoid exp
        bytes_accessed=(x.size * x.dtype.itemsize
                        + 2 * (w1.size + w2.size + w3.size)
                        + 4 * (b1.size + b2.size + b3.size)
                        + B * D_out * jnp.dtype(out_dtype).itemsize),
    )

    return pl.pallas_call(
        _mlp_kernel,
        out_shape=jax.ShapeDtypeStruct((B, D_out), out_dtype),
        grid_spec=pl.GridSpec(
            grid=grid,
            in_specs=[
                pl.BlockSpec((block_b, D_in), lambda i: (i, 0)),   # x tile (streamed, f32, unpadded)
                pl.BlockSpec((D_in, H1), lambda i: (0, 0)),        # w1 (VMEM-resident)
                pl.BlockSpec((1, H1), lambda i: (0, 0)),           # b1
                pl.BlockSpec((H1, H2), lambda i: (0, 0)),          # w2 (VMEM-resident)
                pl.BlockSpec((1, H2), lambda i: (0, 0)),           # b2
                pl.BlockSpec((H2, D_out), lambda i: (0, 0)),       # w3 (VMEM-resident)
                pl.BlockSpec((1, D_out), lambda i: (0, 0)),        # b3
            ],
            out_specs=pl.BlockSpec((block_b, D_out), lambda i: (i, 0)),
        ),
        compiler_params=pltpu.CompilerParams(
            dimension_semantics=("parallel",),       # batch tiles shard across v7x's 2 TensorCores
        ),
        cost_estimate=cost,
    )(x, w1, b1, w2, b2, w3, b3)


def _init_linear(key, fan_in, fan_out):
    # Deterministic init mirroring PyTorch Linear default: U(-1/sqrt(fan_in), 1/sqrt(fan_in)).
    kw, kb = jax.random.split(key)
    bound = 1.0 / jnp.sqrt(jnp.float32(fan_in))
    w = jax.random.uniform(kw, (fan_in, fan_out), jnp.float32, -bound, bound)
    b = jax.random.uniform(kb, (fan_out,), jnp.float32, -bound, bound)
    return w, b


if __name__ == "__main__":
    INPUT_DIM = 504   # module default
    BATCH = 8

    root = jax.random.PRNGKey(0)
    kx, k1, k2, k3 = jax.random.split(root, 4)

    x = jax.random.normal(kx, (BATCH, INPUT_DIM), jnp.float32)
    w1, b1 = _init_linear(k1, INPUT_DIM, 256)
    w2, b2 = _init_linear(k2, 256, 128)
    w3, b3 = _init_linear(k3, 128, INPUT_DIM)

    params = prepare_params(w1, b1, w2, b2, w3, b3)   # one-time cast, not per call
    out = splice_site_mlp(x, params)
    out = jax.block_until_ready(out)
    assert out.shape == (BATCH, INPUT_DIM) and out.dtype == jnp.float32

    # Pure-JAX reference emulating the same bf16-operand / f32-accumulate path.
    def bf(v):
        return v.astype(jnp.bfloat16)

    h1 = jnp.maximum(jnp.dot(bf(x), bf(w1), preferred_element_type=jnp.float32) + b1, 0.0)
    h2 = jnp.maximum(jnp.dot(bf(h1), bf(w2), preferred_element_type=jnp.float32) + b2, 0.0)
    ref = jax.nn.sigmoid(jnp.dot(bf(h2), bf(w3), preferred_element_type=jnp.float32) + b3)

    err = float(jnp.max(jnp.abs(out - ref)))
    assert err < 1e-3, f"max abs err {err}"

    print("KERNEL_OK")
</pallas_src>

<mosaic_0001>
module attributes {stable_mosaic.version = 11 : i64} {
  func.func @_mlp_kernel(%arg0: i32, %arg1: memref<8x504xf32, #tpu.memory_space<vmem>>, %arg2: memref<504x256xbf16, #tpu.memory_space<vmem>>, %arg3: memref<1x256xf32, #tpu.memory_space<vmem>>, %arg4: memref<256x128xbf16, #tpu.memory_space<vmem>>, %arg5: memref<1x128xf32, #tpu.memory_space<vmem>>, %arg6: memref<128x504xbf16, #tpu.memory_space<vmem>>, %arg7: memref<1x504xf32, #tpu.memory_space<vmem>>, %arg8: memref<8x504xf32, #tpu.memory_space<vmem>>) attributes {dimension_semantics = [#tpu.dimension_semantics<parallel>], iteration_bounds = array<i64: 1>, scalar_prefetch = 0 : i64, scratch_operands = 0 : i64, tpu.core_type = #tpu.core_type<tc>, window_params = [{transform_indices = @transform_0, window_bounds = array<i64: 8, 504>}, {pipeline_mode = #tpu.pipeline_mode<synchronous>, transform_indices = @transform_1, window_bounds = array<i64: 504, 256>}, {pipeline_mode = #tpu.pipeline_mode<synchronous>, transform_indices = @transform_2, window_bounds = array<i64: 1, 256>}, {pipeline_mode = #tpu.pipeline_mode<synchronous>, transform_indices = @transform_3, window_bounds = array<i64: 256, 128>}, {pipeline_mode = #tpu.pipeline_mode<synchronous>, transform_indices = @transform_4, window_bounds = array<i64: 1, 128>}, {pipeline_mode = #tpu.pipeline_mode<synchronous>, transform_indices = @transform_5, window_bounds = array<i64: 128, 504>}, {pipeline_mode = #tpu.pipeline_mode<synchronous>, transform_indices = @transform_6, window_bounds = array<i64: 1, 504>}, {transform_indices = @transform_7, window_bounds = array<i64: 8, 504>}]} {
    %c0 = arith.constant 0 : index
    %c0_0 = arith.constant 0 : index
    %0 = vector.load %arg1[%c0, %c0_0] : memref<8x504xf32, #tpu.memory_space<vmem>>, vector<8x504xf32>
    %1 = arith.truncf %0 : vector<8x504xf32> to vector<8x504xbf16>
    %c0_1 = arith.constant 0 : index
    %c0_2 = arith.constant 0 : index
    %2 = vector.load %arg2[%c0_1, %c0_2] : memref<504x256xbf16, #tpu.memory_space<vmem>>, vector<504x256xbf16>
    %cst = arith.constant dense<0.000000e+00> : vector<8x256xf32>
    %3 = tpu.matmul %1, %2, %cst {dimension_numbers = #tpu.dot_dimension_numbers<[1], [0], [0], [1], [0, 0, 1, 1], [], []>} : vector<8x504xbf16>, vector<504x256xbf16>, vector<8x256xf32> -> vector<8x256xf32>
    %c0_3 = arith.constant 0 : index
    %c0_4 = arith.constant 0 : index
    %4 = vector.load %arg3[%c0_3, %c0_4] : memref<1x256xf32, #tpu.memory_space<vmem>>, vector<1x256xf32>
    %5 = vector.broadcast %4 : vector<1x256xf32> to vector<8x256xf32>
    %6 = arith.addf %3, %5 : vector<8x256xf32>
    %cst_5 = arith.constant 0.000000e+00 : f32
    %7 = vector.broadcast %cst_5 : f32 to vector<8x256xf32>
    %8 = arith.maximumf %6, %7 : vector<8x256xf32>
    %9 = arith.truncf %8 : vector<8x256xf32> to vector<8x256xbf16>
    %c0_6 = arith.constant 0 : index
    %c0_7 = arith.constant 0 : index
    %10 = vector.load %arg4[%c0_6, %c0_7] : memref<256x128xbf16, #tpu.memory_space<vmem>>, vector<256x128xbf16>
    %cst_8 = arith.constant dense<0.000000e+00> : vector<8x128xf32>
    %11 = tpu.matmul %9, %10, %cst_8 {dimension_numbers = #tpu.dot_dimension_numbers<[1], [0], [0], [1], [0, 0, 1, 1], [], []>} : vector<8x256xbf16>, vector<256x128xbf16>, vector<8x128xf32> -> vector<8x128xf32>
    %c0_9 = arith.constant 0 : index
    %c0_10 = arith.constant 0 : index
    %12 = vector.load %arg5[%c0_9, %c0_10] : memref<1x128xf32, #tpu.memory_space<vmem>>, vector<1x128xf32>
    %13 = vector.broadcast %12 : vector<1x128xf32> to vector<8x128xf32>
    %14 = arith.addf %11, %13 : vector<8x128xf32>
    %cst_11 = arith.constant 0.000000e+00 : f32
    %15 = vector.broadcast %cst_11 : f32 to vector<8x128xf32>
    %16 = arith.maximumf %14, %15 : vector<8x128xf32>
    %17 = arith.truncf %16 : vector<8x128xf32> to vector<8x128xbf16>
    %c0_12 = arith.constant 0 : index
    %c0_13 = arith.constant 0 : index
    %18 = vector.load %arg6[%c0_12, %c0_13] : memref<128x504xbf16, #tpu.memory_space<vmem>>, vector<128x504xbf16>
    %cst_14 = arith.constant dense<0.000000e+00> : vector<8x504xf32>
    %19 = tpu.matmul %17, %18, %cst_14 {dimension_numbers = #tpu.dot_dimension_numbers<[1], [0], [0], [1], [0, 0, 1, 1], [], []>} : vector<8x128xbf16>, vector<128x504xbf16>, vector<8x504xf32> -> vector<8x504xf32>
    %c0_15 = arith.constant 0 : index
    %c0_16 = arith.constant 0 : index
    %20 = vector.load %arg7[%c0_15, %c0_16] : memref<1x504xf32, #tpu.memory_space<vmem>>, vector<1x504xf32>
    %21 = vector.broadcast %20 : vector<1x504xf32> to vector<8x504xf32>
    %22 = arith.addf %19, %21 : vector<8x504xf32>
    %23 = arith.negf %22 : vector<8x504xf32>
    %24 = math.exp %23 : vector<8x504xf32>
    %cst_17 = arith.constant 1.000000e+00 : f32
    %25 = vector.broadcast %cst_17 : f32 to vector<8x504xf32>
    %26 = arith.addf %25, %24 : vector<8x504xf32>
    %27 = arith.divf %25, %26 : vector<8x504xf32>
    %c0_18 = arith.constant 0 : index
    %c0_19 = arith.constant 0 : index
    %28 = vector.load %arg8[%c0_18, %c0_19] : memref<8x504xf32, #tpu.memory_space<vmem>>, vector<8x504xf32>
    tpu.vector_store %arg8[%c0_18, %c0_19], %27 {strides = array<i32>} : memref<8x504xf32, #tpu.memory_space<vmem>>, vector<8x504xf32>,
    return
  }
  func.func @transform_0(%arg0: i32) -> (i32, i32) {
    %c0_i32 = arith.constant 0 : i32
    %c0_i32_0 = arith.constant 0 : i32
    return %arg0, %c0_i32 : i32, i32
  }
  func.func @transform_1(%arg0: i32) -> (i32, i32) {
    %c0_i32 = arith.constant 0 : i32
    %c0_i32_0 = arith.constant 0 : i32
    %c0_i32_1 = arith.constant 0 : i32
    return %c0_i32, %c0_i32_0 : i32, i32
  }
  func.func @transform_2(%arg0: i32) -> (i32, i32) {
    %c0_i32 = arith.constant 0 : i32
    %c0_i32_0 = arith.constant 0 : i32
    %c0_i32_1 = arith.constant 0 : i32
    return %c0_i32, %c0_i32_0 : i32, i32
  }
  func.func @transform_3(%arg0: i32) -> (i32, i32) {
    %c0_i32 = arith.constant 0 : i32
    %c0_i32_0 = arith.constant 0 : i32
    %c0_i32_1 = arith.constant 0 : i32
    return %c0_i32, %c0_i32_0 : i32, i32
  }
  func.func @transform_4(%arg0: i32) -> (i32, i32) {
    %c0_i32 = arith.constant 0 : i32
    %c0_i32_0 = arith.constant 0 : i32
    %c0_i32_1 = arith.constant 0 : i32
    return %c0_i32, %c0_i32_0 : i32, i32
  }
  func.func @transform_5(%arg0: i32) -> (i32, i32) {
    %c0_i32 = arith.constant 0 : i32
    %c0_i32_0 = arith.constant 0 : i32
    %c0_i32_1 = arith.constant 0 : i32
    return %c0_i32, %c0_i32_0 : i32, i32
  }
  func.func @transform_6(%arg0: i32) -> (i32, i32) {
    %c0_i32 = arith.constant 0 : i32
    %c0_i32_0 = arith.constant 0 : i32
    %c0_i32_1 = arith.constant 0 : i32
    return %c0_i32, %c0_i32_0 : i32, i32
  }
  func.func @transform_7(%arg0: i32) -> (i32, i32) {
    %c0_i32 = arith.constant 0 : i32
    %c0_i32_0 = arith.constant 0 : i32
    return %arg0, %c0_i32 : i32, i32
  }
}

</mosaic_0001>

<llo_original>
// kernel: tpu_custom_call.1
$region0: #{tpu_custom_call.1}
  #allocation0 [shape = 'u32[]', space=smem, size = 0x4, offset = 0x4, fixed_abs, tag = 'smem constant byte address 0x4 - core index']
  #allocation1 [shape = 'u32[144,128]{1,0:T(1,128)}', space=vmem, size = 0x12000, scoped, tag = 'internal scratch']
  %s0 = inlined_call_operand.hbm [shape: f32[8,504], index: 0, kind: input, shape index: {}]
  %s1 = inlined_call_operand.vmem [shape: bf16[504,256], index: 1, kind: input, shape index: {}]
  %s2 = inlined_call_operand.hbm [shape: f32[1,256], index: 2, kind: input, shape index: {}]
  %s3 = inlined_call_operand.hbm [shape: bf16[256,128], index: 3, kind: input, shape index: {}]
  %s4 = inlined_call_operand.vmem [shape: f32[1,128], index: 4, kind: input, shape index: {}]
  %s5 = inlined_call_operand.vmem [shape: bf16[128,504], index: 5, kind: input, shape index: {}]
  %s6 = inlined_call_operand.vmem [shape: f32[1,504], index: 6, kind: input, shape index: {}]
  %s7 = inlined_call_operand.hbm [shape: f32[8,504], index: 7, kind: output, shape index: {}]
  %s8 = sld [smem:[#allocation0]]
  $region50: #{tpu_custom_call.1} parent=0
    _
  %s10 = ssub.s32 1, %s8
  %s11 = scalar_select 0, %s10, %s8
  $region1: #{tpu_custom_call.1} parent=0
    #allocation2 [shape = 'u8[16384]{0}', space=vmem, size = 0x4000, scoped, tag = 'input window, operand 0, single buffered']
    #allocation3 [shape = 's32[1]{0}', space=sflag, size = 0x4, scoped, tag = 'scoped memory for tpu_custom_call.1']
    #allocation4 [shape = 's32[1]{0}', space=sflag, size = 0x4, scoped, tag = 'scoped memory for tpu_custom_call.1']
    #allocation5 [shape = 'u8[1024]{0}', space=vmem, size = 0x400, scoped, tag = 'input window, operand 2, single buffered']
    #allocation6 [shape = 's32[1]{0}', space=sflag, size = 0x4, scoped, tag = 'scoped memory for tpu_custom_call.1']
    #allocation7 [shape = 'u8[65536]{0}', space=vmem, size = 0x10000, scoped, tag = 'input window, operand 3, single buffered']
    #allocation8 [shape = 'u8[16384]{0}', space=vmem, size = 0x4000, scoped, tag = 'output window, operand 0, single buffered']
    %12 = vsyncpa [#allocation3], 0
    %13 = vsyncpa [#allocation6], 0
    %14 = vsyncpa [#allocation4], 0
    // Predicated region
    $region2: #{tpu_custom_call.1} parent=1 // pred_check
      _
    $region3: #{tpu_custom_call.1} parent=1 // pred_check_branch
      %16 = sbr.rel (0) target = $region5
    $region4: #{tpu_custom_call.1} parent=1 // pred_region
      %s18 = ssub.s32 512, 512
      %19 = vsyncadd [#allocation3], %s18
      %s21 = sshll.u32 [#allocation2], 4
      %s22 = int_to_ptr.vmem [resolvable:$true] %s21
      %24 = dma.hbm_to_vmem [thread:$0]  %s0, 512, %s22, [#allocation3]
    $region5: #{tpu_custom_call.1} parent=1 // pred_fallthru
      _
    // Predicated region
    $region6: #{tpu_custom_call.1} parent=1 // pred_check
      _
    $region7: #{tpu_custom_call.1} parent=1 // pred_check_branch
      %26 = sbr.rel (0) target = $region9
    $region8: #{tpu_custom_call.1} parent=1 // pred_region
      _
    $region9: #{tpu_custom_call.1} parent=1 // pred_fallthru
      _
    // Predicated region
    $region10: #{tpu_custom_call.1} parent=1 // pred_check
      _
    $region11: #{tpu_custom_call.1} parent=1 // pred_check_branch
      %28 = sbr.rel (0) target = $region13
    $region12: #{tpu_custom_call.1} parent=1 // pred_region
      %s30 = ssub.s32 32, 32
      %31 = vsyncadd [#allocation6], %s30
      %s33 = sshll.u32 [#allocation5], 4
      %s34 = int_to_ptr.vmem [resolvable:$true] %s33
      %36 = dma.hbm_to_vmem [thread:$0]  %s2, 32, %s34, [#allocation6]
    $region13: #{tpu_custom_call.1} parent=1 // pred_fallthru
      _
    // Predicated region
    $region14: #{tpu_custom_call.1} parent=1 // pred_check
      _
    $region15: #{tpu_custom_call.1} parent=1 // pred_check_branch
      %38 = sbr.rel (0) target = $region17
    $region16: #{tpu_custom_call.1} parent=1 // pred_region
      %s40 = ssub.s32 2048, 2048
      %41 = vsyncadd [#allocation6], %s40
      %s42 = sshll.u32 [#allocation7], 4
      %s43 = int_to_ptr.vmem [resolvable:$true] %s42
      %48 = dma.hbm_to_vmem [thread:$0]  %s3, 2048, %s43, [#allocation6], 64, 64, 4
    $region17: #{tpu_custom_call.1} parent=1 // pred_fallthru
      _
    // Predicated region
    $region18: #{tpu_custom_call.1} parent=1 // pred_check
      _
    $region19: #{tpu_custom_call.1} parent=1 // pred_check_branch
      %50 = sbr.rel (0) target = $region21
    $region20: #{tpu_custom_call.1} parent=1 // pred_region
      _
    $region21: #{tpu_custom_call.1} parent=1 // pred_fallthru
      _
    // Predicated region
    $region22: #{tpu_custom_call.1} parent=1 // pred_check
      _
    $region23: #{tpu_custom_call.1} parent=1 // pred_check_branch
      %52 = sbr.rel (0) target = $region25
    $region24: #{tpu_custom_call.1} parent=1 // pred_region
      _
    $region25: #{tpu_custom_call.1} parent=1 // pred_fallthru
      _
    // Predicated region
    $region26: #{tpu_custom_call.1} parent=1 // pred_check
      _
    $region27: #{tpu_custom_call.1} parent=1 // pred_check_branch
      %54 = sbr.rel (0) target = $region29
    $region28: #{tpu_custom_call.1} parent=1 // pred_region
      _
    $region29: #{tpu_custom_call.1} parent=1 // pred_fallthru
      _
    // Predicated region
    $region30: #{tpu_custom_call.1} parent=1 // pred_check
      _
    $region31: #{tpu_custom_call.1} parent=1 // pred_check_branch
      %56 = sbr.rel (0) target = $region33
    $region32: #{tpu_custom_call.1} parent=1 // pred_region
      %57 = dma.done [#allocation3], 512
    $region33: #{tpu_custom_call.1} parent=1 // pred_fallthru
      _
    // Predicated region
    $region34: #{tpu_custom_call.1} parent=1 // pred_check
      _
    $region35: #{tpu_custom_call.1} parent=1 // pred_check_branch
      %59 = sbr.rel (0) target = $region37
    $region36: #{tpu_custom_call.1} parent=1 // pred_region
      %60 = dma.done [#allocation6], 32
    $region37: #{tpu_custom_call.1} parent=1 // pred_fallthru
      _
    // Predicated region
    $region38: #{tpu_custom_call.1} parent=1 // pred_check
      _
    $region39: #{tpu_custom_call.1} parent=1 // pred_check_branch
      %62 = sbr.rel (0) target = $region41
    $region40: #{tpu_custom_call.1} parent=1 // pred_region
      %63 = dma.done [#allocation6], 2048
    $region41: #{tpu_custom_call.1} parent=1 // pred_fallthru
      _
    %v65 = vld [vmem:[#allocation2] sm:$0xff]
    %v66 = vld [vmem:[#allocation2 + $0x8] sm:$0xff]
    %v67 = vld [vmem:[#allocation2 + $0x10] sm:$0xff]
    %v68 = vld [vmem:[#allocation2 + $0x18] sm:$0xff]
    %v69 = vpack.c.bf16 %v65, %v65
    %v70 = vpack.c.bf16 %v66, %v66
    %v71 = vpack.c.bf16 %v67, %v67
    %v72 = vpack.c.bf16 %v68, %v68
    %v73 = vld [vmem:[%s1] sm:$0xff]
    %v74 = vld [vmem:[%s1 + $0x8] sm:$0xff]
    %v75 = vld [vmem:[%s1 + $0x10] sm:$0xff]
    %v76 = vld [vmem:[%s1 + $0x18] sm:$0xff]
    %v77 = vld [vmem:[%s1 + $0x20] sm:$0xff]
    %v78 = vld [vmem:[%s1 + $0x28] sm:$0xff]
    %v79 = vld [vmem:[%s1 + $0x30] sm:$0xff]
    %v80 = vld [vmem:[%s1 + $0x38] sm:$0xff]
    %v81 = vld [vmem:[%s1 + $0x40] sm:$0xff]
    %v82 = vld [vmem:[%s1 + $0x48] sm:$0xff]
    %v83 = vld [vmem:[%s1 + $0x50] sm:$0xff]
    %v84 = vld [vmem:[%s1 + $0x58] sm:$0xff]
    %v85 = vld [vmem:[%s1 + $0x60] sm:$0xff]
    %v86 = vld [vmem:[%s1 + $0x68] sm:$0xff]
    %v87 = vld [vmem:[%s1 + $0x70] sm:$0xff]
    %v88 = vld [vmem:[%s1 + $0x78] sm:$0xff]
    %v89 = vld [vmem:[%s1 + $0x80] sm:$0xff]
    %v90 = vld [vmem:[%s1 + $0x88] sm:$0xff]
    %v91 = vld [vmem:[%s1 + $0x90] sm:$0xff]
    %v92 = vld [vmem:[%s1 + $0x98] sm:$0xff]
    %v93 = vld [vmem:[%s1 + $0xa0] sm:$0xff]
    %v94 = vld [vmem:[%s1 + $0xa8] sm:$0xff]
    %v95 = vld [vmem:[%s1 + $0xb0] sm:$0xff]
    %v96 = vld [vmem:[%s1 + $0xb8] sm:$0xff]
    %v97 = vld [vmem:[%s1 + $0xc0] sm:$0xff]
    %v98 = vld [vmem:[%s1 + $0xc8] sm:$0xff]
    %v99 = vld [vmem:[%s1 + $0xd0] sm:$0xff]
    %v100 = vld [vmem:[%s1 + $0xd8] sm:$0xff]
    %v101 = vld [vmem:[%s1 + $0xe0] sm:$0xff]
    %v102 = vld [vmem:[%s1 + $0xe8] sm:$0xff]
    %v103 = vld [vmem:[%s1 + $0xf0] sm:$0xff]
    %v104 = vld [vmem:[%s1 + $0xf8] sm:$0xff]
    %v105 = vld [vmem:[%s1 + $0x100] sm:$0xff]
    %v106 = vld [vmem:[%s1 + $0x108] sm:$0xff]
    %v107 = vld [vmem:[%s1 + $0x110] sm:$0xff]
    %v108 = vld [vmem:[%s1 + $0x118] sm:$0xff]
    %v109 = vld [vmem:[%s1 + $0x120] sm:$0xff]
    %v110 = vld [vmem:[%s1 + $0x128] sm:$0xff]
    %v111 = vld [vmem:[%s1 + $0x130] sm:$0xff]
    %v112 = vld [vmem:[%s1 + $0x138] sm:$0xff]
    %v113 = vld [vmem:[%s1 + $0x140] sm:$0xff]
    %v114 = vld [vmem:[%s1 + $0x148] sm:$0xff]
    %v115 = vld [vmem:[%s1 + $0x150] sm:$0xff]
    %v116 = vld [vmem:[%s1 + $0x158] sm:$0xff]
    %v117 = vld [vmem:[%s1 + $0x160] sm:$0xff]
    %v118 = vld [vmem:[%s1 + $0x168] sm:$0xff]
    %v119 = vld [vmem:[%s1 + $0x170] sm:$0xff]
    %v120 = vld [vmem:[%s1 + $0x178] sm:$0xff]
    %v121 = vld [vmem:[%s1 + $0x180] sm:$0xff]
    %v122 = vld [vmem:[%s1 + $0x188] sm:$0xff]
    %v123 = vld [vmem:[%s1 + $0x190] sm:$0xff]
    %v124 = vld [vmem:[%s1 + $0x198] sm:$0xff]
    %v125 = vld [vmem:[%s1 + $0x1a0] sm:$0xff]
    %v126 = vld [vmem:[%s1 + $0x1a8] sm:$0xff]
    %v127 = vld [vmem:[%s1 + $0x1b0] sm:$0xff]
    %v128 = vld [vmem:[%s1 + $0x1b8] sm:$0xff]
    %v129 = vld [vmem:[%s1 + $0x1c0] sm:$0xff]
    %v130 = vld [vmem:[%s1 + $0x1c8] sm:$0xff]
    %v131 = vld [vmem:[%s1 + $0x1d0] sm:$0xff]
    %v132 = vld [vmem:[%s1 + $0x1d8] sm:$0xff]
    %v133 = vld [vmem:[%s1 + $0x1e0] sm:$0xff]
    %v134 = vld [vmem:[%s1 + $0x1e8] sm:$0xff]
    %v135 = vld [vmem:[%s1 + $0x1f0] sm:$0xff]
    %v136 = vld [vmem:[#allocation5] sm:$0x3]
    %v138 = vlaneseq
    %v139 = vshrl.u32 %v138, 7
    %v140 = vsub.s32 0, %v139
    %v141 = vrot.slane %v136, %v140
    %v142 = vlaneseq
    %v143 = vshrl.u32 %v142, 7
    %v144 = vsub.s32 1, %v143
    %v145 = vrot.slane %v136, %v144
    %v211 = vunpack.c.l.b16 %v73
    %v212 = vunpack.c.h.b16 %v73
    %v213 = vunpack.c.l.b16 %v74
    %v214 = vunpack.c.h.b16 %v74
    %v215 = vunpack.c.l.b16 %v75
    %v216 = vunpack.c.h.b16 %v75
    %v217 = vunpack.c.l.b16 %v76
    %v218 = vunpack.c.h.b16 %v76
    %v219 = vunpack.c.l.b16 %v77
    %v220 = vunpack.c.h.b16 %v77
    %v221 = vunpack.c.l.b16 %v78
    %v222 = vunpack.c.h.b16 %v78
    %v223 = vunpack.c.l.b16 %v79
    %v224 = vunpack.c.h.b16 %v79
    %v225 = vunpack.c.l.b16 %v80
    %v226 = vunpack.c.h.b16 %v80
    %v227 = vunpack.c.l.b16 %v81
    %v228 = vunpack.c.h.b16 %v81
    %v229 = vunpack.c.l.b16 %v82
    %v230 = vunpack.c.h.b16 %v82
    %v231 = vunpack.c.l.b16 %v83
    %v232 = vunpack.c.h.b16 %v83
    %v233 = vunpack.c.l.b16 %v84
    %v234 = vunpack.c.h.b16 %v84
    %v235 = vunpack.c.l.b16 %v85
    %v236 = vunpack.c.h.b16 %v85
    %v237 = vunpack.c.l.b16 %v86
    %v238 = vunpack.c.h.b16 %v86
    %v239 = vunpack.c.l.b16 %v87
    %v240 = vunpack.c.h.b16 %v87
    %v241 = vunpack.c.l.b16 %v88
    %v242 = vunpack.c.h.b16 %v88
    %v243 = vunpack.c.l.b16 %v89
    %v244 = vunpack.c.h.b16 %v89
    %v245 = vunpack.c.l.b16 %v90
    %v246 = vunpack.c.h.b16 %v90
    %v247 = vunpack.c.l.b16 %v91
    %v248 = vunpack.c.h.b16 %v91
    %v249 = vunpack.c.l.b16 %v92
    %v250 = vunpack.c.h.b16 %v92
    %v251 = vunpack.c.l.b16 %v93
    %v252 = vunpack.c.h.b16 %v93
    %v253 = vunpack.c.l.b16 %v94
    %v254 = vunpack.c.h.b16 %v94
    %v255 = vunpack.c.l.b16 %v95
    %v256 = vunpack.c.h.b16 %v95
    %v257 = vunpack.c.l.b16 %v96
    %v258 = vunpack.c.h.b16 %v96
    %v259 = vunpack.c.l.b16 %v97
    %v260 = vunpack.c.h.b16 %v97
    %v261 = vunpack.c.l.b16 %v98
    %v262 = vunpack.c.h.b16 %v98
    %v263 = vunpack.c.l.b16 %v99
    %v264 = vunpack.c.h.b16 %v99
    %v265 = vunpack.c.l.b16 %v100
    %v266 = vunpack.c.h.b16 %v100
    %v267 = vunpack.c.l.b16 %v101
    %v268 = vunpack.c.h.b16 %v101
    %v269 = vunpack.c.l.b16 %v102
    %v270 = vunpack.c.h.b16 %v102
    %v271 = vunpack.c.l.b16 %v103
    %v272 = vunpack.c.h.b16 %v103
    %v273 = vunpack.c.l.b16 %v104
    %v274 = vunpack.c.h.b16 %v104
    %v275 = vunpack.c.l.b16 %v105
    %v276 = vunpack.c.h.b16 %v105
    %v277 = vunpack.c.l.b16 %v106
    %v278 = vunpack.c.h.b16 %v106
    %v279 = vunpack.c.l.b16 %v107
    %v280 = vunpack.c.h.b16 %v107
    %v281 = vunpack.c.l.b16 %v108
    %v282 = vunpack.c.h.b16 %v108
    %v283 = vunpack.c.l.b16 %v109
    %v284 = vunpack.c.h.b16 %v109
    %v285 = vunpack.c.l.b16 %v110
    %v286 = vunpack.c.h.b16 %v110
    %v287 = vunpack.c.l.b16 %v111
    %v288 = vunpack.c.h.b16 %v111
    %v289 = vunpack.c.l.b16 %v112
    %v290 = vunpack.c.h.b16 %v112
    %v291 = vunpack.c.l.b16 %v113
    %v292 = vunpack.c.h.b16 %v113
    %v293 = vunpack.c.l.b16 %v114
    %v294 = vunpack.c.h.b16 %v114
    %v295 = vunpack.c.l.b16 %v115
    %v296 = vunpack.c.h.b16 %v115
    %v297 = vunpack.c.l.b16 %v116
    %v298 = vunpack.c.h.b16 %v116
    %v299 = vunpack.c.l.b16 %v117
    %v300 = vunpack.c.h.b16 %v117
    %v301 = vunpack.c.l.b16 %v118
    %v302 = vunpack.c.h.b16 %v118
    %v303 = vunpack.c.l.b16 %v119
    %v304 = vunpack.c.h.b16 %v119
    %v305 = vunpack.c.l.b16 %v120
    %v306 = vunpack.c.h.b16 %v120
    %v307 = vunpack.c.l.b16 %v121
    %v308 = vunpack.c.h.b16 %v121
    %v309 = vunpack.c.l.b16 %v122
    %v310 = vunpack.c.h.b16 %v122
    %v311 = vunpack.c.l.b16 %v123
    %v312 = vunpack.c.h.b16 %v123
    %v313 = vunpack.c.l.b16 %v124
    %v314 = vunpack.c.h.b16 %v124
    %v315 = vunpack.c.l.b16 %v125
    %v316 = vunpack.c.h.b16 %v125
    %v317 = vunpack.c.l.b16 %v126
    %v318 = vunpack.c.h.b16 %v126
    %v319 = vunpack.c.l.b16 %v127
    %v320 = vunpack.c.h.b16 %v127
    %v321 = vunpack.c.l.b16 %v128
    %v322 = vunpack.c.h.b16 %v128
    %v323 = vunpack.c.l.b16 %v129
    %v324 = vunpack.c.h.b16 %v129
    %v325 = vunpack.c.l.b16 %v130
    %v326 = vunpack.c.h.b16 %v130
    %v327 = vunpack.c.l.b16 %v131
    %v328 = vunpack.c.h.b16 %v131
    %v329 = vunpack.c.l.b16 %v132
    %v330 = vunpack.c.h.b16 %v132
    %v331 = vunpack.c.l.b16 %v133
    %v332 = vunpack.c.h.b16 %v133
    %v333 = vunpack.c.l.b16 %v134
    %v334 = vunpack.c.h.b16 %v134
    %v335 = vunpack.c.l.b16 %v135
    %v336 = vunpack.c.h.b16 %v135
    %v337 = vpack.c.b16 %v213, %v211
    %v338 = vpack.c.b16 %v214, %v212
    %v339 = vpack.c.b16 %v217, %v215
    %v340 = vpack.c.b16 %v218, %v216
    %v341 = vpack.c.b16 %v221, %v219
    %v342 = vpack.c.b16 %v222, %v220
    %v343 = vpack.c.b16 %v225, %v223
    %v344 = vpack.c.b16 %v226, %v224
    %v345 = vpack.c.b16 %v229, %v227
    %v346 = vpack.c.b16 %v230, %v228
    %v347 = vpack.c.b16 %v233, %v231
    %v348 = vpack.c.b16 %v234, %v232
    %v349 = vpack.c.b16 %v237, %v235
    %v350 = vpack.c.b16 %v238, %v236
    %v351 = vpack.c.b16 %v241, %v239
    %v352 = vpack.c.b16 %v242, %v240
    %v353 = vpack.c.b16 %v245, %v243
    %v354 = vpack.c.b16 %v246, %v244
    %v355 = vpack.c.b16 %v249, %v247
    %v356 = vpack.c.b16 %v250, %v248
    %v357 = vpack.c.b16 %v253, %v251
    %v358 = vpack.c.b16 %v254, %v252
    %v359 = vpack.c.b16 %v257, %v255
    %v360 = vpack.c.b16 %v258, %v256
    %v361 = vpack.c.b16 %v261, %v259
    %v362 = vpack.c.b16 %v262, %v260
    %v363 = vpack.c.b16 %v265, %v263
    %v364 = vpack.c.b16 %v266, %v264
    %v365 = vpack.c.b16 %v269, %v267
    %v366 = vpack.c.b16 %v270, %v268
    %v367 = vpack.c.b16 %v273, %v271
    %v368 = vpack.c.b16 %v274, %v272
    %v369 = vpack.c.b16 %v277, %v275
    %v370 = vpack.c.b16 %v278, %v276
    %v371 = vpack.c.b16 %v281, %v279
    %v372 = vpack.c.b16 %v282, %v280
    %v373 = vpack.c.b16 %v285, %v283
    %v374 = vpack.c.b16 %v286, %v284
    %v375 = vpack.c.b16 %v289, %v287
    %v376 = vpack.c.b16 %v290, %v288
    %v377 = vpack.c.b16 %v293, %v291
    %v378 = vpack.c.b16 %v294, %v292
    %v379 = vpack.c.b16 %v297, %v295
    %v380 = vpack.c.b16 %v298, %v296
    %v381 = vpack.c.b16 %v301, %v299
    %v382 = vpack.c.b16 %v302, %v300
    %v383 = vpack.c.b16 %v305, %v303
    %v384 = vpack.c.b16 %v306, %v304
    %v385 = vpack.c.b16 %v309, %v307
    %v386 = vpack.c.b16 %v310, %v308
    %v387 = vpack.c.b16 %v313, %v311
    %v388 = vpack.c.b16 %v314, %v312
    %v389 = vpack.c.b16 %v317, %v315
    %v390 = vpack.c.b16 %v318, %v316
    %v391 = vpack.c.b16 %v321, %v319
    %v392 = vpack.c.b16 %v322, %v320
    %v393 = vpack.c.b16 %v325, %v323
    %v394 = vpack.c.b16 %v326, %v324
    %v395 = vpack.c.b16 %v329, %v327
    %v396 = vpack.c.b16 %v330, %v328
    %v397 = vpack.c.b16 %v333, %v331
    %v398 = vpack.c.b16 %v334, %v332
    %v399 = vpack.c.b16 %v335, %v335
    %v400 = vpack.c.b16 %v336, %v336
    %vm463 = vcmask 982016
    %v465 = vsel %vm463, %v72, 0
    %vm467 = vcmask 1043456
    %v469 = vsel %vm467, %v399, 0
    %v472 = vsel %vm467, %v400, 0
    %474 = vmatprep.subr.bf16.mxu0 %v352
    %475 = vmatpush1.bf16.msra.mxu0 %v351
    %476 = vmatprep.subr.bf16.mxu0 %v350
    %477 = vmatpush1.bf16.msra.mxu0 %v349
    %478 = vmatprep.subr.bf16.mxu0 %v348
    %479 = vmatpush1.bf16.msra.mxu0 %v347
    %480 = vmatprep.subr.bf16.mxu0 %v346
    %481 = vmatpush1.bf16.msra.mxu0 %v345
    %482 = vmatprep.subr.bf16.mxu0 %v344
    %483 = vmatpush1.bf16.msra.mxu0 %v343
    %484 = vmatprep.subr.bf16.mxu0 %v342
    %485 = vmatpush1.bf16.msra.mxu0 %v341
    %486 = vmatprep.subr.bf16.mxu0 %v340
    %487 = vmatpush1.bf16.msra.mxu0 %v339
    %488 = vmatprep.subr.bf16.mxu0 %v338
    %489 = vmatpush1.bf16.msra.mxu0 %v337
    %490 = vmatprep.subr.bf16.mxu0 %v368
    %491 = vmatpush2.bf16.msra.mxu0 %v367
    %492 = vmatprep.subr.bf16.mxu0 %v366
    %493 = vmatpush2.bf16.msra.mxu0 %v365
    %494 = vmatprep.subr.bf16.mxu0 %v364
    %495 = vmatpush2.bf16.msra.mxu0 %v363
    %496 = vmatprep.subr.bf16.mxu0 %v362
    %497 = vmatpush2.bf16.msra.mxu0 %v361
    %498 = vmatprep.subr.bf16.mxu0 %v360
    %499 = vmatpush2.bf16.msra.mxu0 %v359
    %500 = vmatprep.subr.bf16.mxu0 %v358
    %501 = vmatpush2.bf16.msra.mxu0 %v357
    %502 = vmatprep.subr.bf16.mxu0 %v356
    %503 = vmatpush2.bf16.msra.mxu0 %v355
    %504 = vmatprep.subr.bf16.mxu0 %v354
    %505 = vmatpush2.bf16.msra.mxu0 %v353
    %506 = vmatprep.mubr.bf16.mxu0 %v70
    %507 = vmatmul.mubr.bf16.gmra.mxu0 %v69
    %v508 = vpop.f32.mrf.mxu0
    %v509 = vadd.f32 %v141, %v508
    %v510 = vpop.f32.mrf.mxu0
    %v511 = vadd.f32 %v145, %v510
    %v512 = vpop.f32.mrf.mxu0
    %v513 = vpop.f32.mrf.mxu0
    %514 = vdwg.mxu0
    %515 = vmatprep.subr.bf16.mxu0 %v384
    %516 = vmatpush1.bf16.msra.mxu0 %v383
    %517 = vmatprep.subr.bf16.mxu0 %v382
    %518 = vmatpush1.bf16.msra.mxu0 %v381
    %519 = vmatprep.subr.bf16.mxu0 %v380
    %520 = vmatpush1.bf16.msra.mxu0 %v379
    %521 = vmatprep.subr.bf16.mxu0 %v378
    %522 = vmatpush1.bf16.msra.mxu0 %v377
    %523 = vmatprep.subr.bf16.mxu0 %v376
    %524 = vmatpush1.bf16.msra.mxu0 %v375
    %525 = vmatprep.subr.bf16.mxu0 %v374
    %526 = vmatpush1.bf16.msra.mxu0 %v373
    %527 = vmatprep.subr.bf16.mxu0 %v372
    %528 = vmatpush1.bf16.msra.mxu0 %v371
    %529 = vmatprep.subr.bf16.mxu0 %v370
    %530 = vmatpush1.bf16.msra.mxu0 %v369
    %531 = vmatprep.subr.bf16.mxu0 %v472
    %532 = vmatpush2.bf16.msra.mxu0 %v469
    %533 = vmatprep.subr.bf16.mxu0 %v398
    %534 = vmatpush2.bf16.msra.mxu0 %v397
    %535 = vmatprep.subr.bf16.mxu0 %v396
    %536 = vmatpush2.bf16.msra.mxu0 %v395
    %537 = vmatprep.subr.bf16.mxu0 %v394
    %538 = vmatpush2.bf16.msra.mxu0 %v393
    %539 = vmatprep.subr.bf16.mxu0 %v392
    %540 = vmatpush2.bf16.msra.mxu0 %v391
    %541 = vmatprep.subr.bf16.mxu0 %v390
    %542 = vmatpush2.bf16.msra.mxu0 %v389
    %543 = vmatprep.subr.bf16.mxu0 %v388
    %544 = vmatpush2.bf16.msra.mxu0 %v387
    %545 = vmatprep.subr.bf16.mxu0 %v386
    %546 = vmatpush2.bf16.msra.mxu0 %v385
    %547 = vmatprep.mubr.bf16.mxu0 %v465
    %548 = vmatmul.mubr.bf16.gmra.mxu0 %v71
    %v549 = vpop.f32.mrf.mxu0
    %v550 = vadd.f32 %v509, %v549
    %v551 = vpop.f32.mrf.mxu0
    %v552 = vadd.f32 %v511, %v551
    %v553 = vpop.f32.mrf.mxu0
    %v554 = vpop.f32.mrf.mxu0
    %555 = vdwg.mxu0
    %v556 = vmax.f32 %v550, 0.0
    %v557 = vmax.f32 %v552, 0.0
    %v558 = vpack.c.bf16 %v556, %v556
    %v559 = vpack.c.bf16 %v557, %v557
    %v560 = vld [vmem:[#allocation7] sm:$0xf]
    %v561 = vld [vmem:[#allocation7 + $0x4] sm:$0xf]
    %v562 = vld [vmem:[#allocation7 + $0x8] sm:$0xf]
    %v563 = vld [vmem:[#allocation7 + $0xc] sm:$0xf]
    %v564 = vld [vmem:[#allocation7 + $0x10] sm:$0xf]
    %v565 = vld [vmem:[#allocation7 + $0x14] sm:$0xf]
    %v566 = vld [vmem:[#allocation7 + $0x18] sm:$0xf]
    %v567 = vld [vmem:[#allocation7 + $0x1c] sm:$0xf]
    %v568 = vld [vmem:[#allocation7 + $0x20] sm:$0xf]
    %v569 = vld [vmem:[#allocation7 + $0x24] sm:$0xf]
    %v570 = vld [vmem:[#allocation7 + $0x28] sm:$0xf]
    %v571 = vld [vmem:[#allocation7 + $0x2c] sm:$0xf]
    %v572 = vld [vmem:[#allocation7 + $0x30] sm:$0xf]
    %v573 = vld [vmem:[#allocation7 + $0x34] sm:$0xf]
    %v574 = vld [vmem:[#allocation7 + $0x38] sm:$0xf]
    %v575 = vld [vmem:[#allocation7 + $0x3c] sm:$0xf]
    %v576 = vld [vmem:[#allocation7 + $0x40] sm:$0xf]
    %v577 = vld [vmem:[#allocation7 + $0x44] sm:$0xf]
    %v578 = vld [vmem:[#allocation7 + $0x48] sm:$0xf]
    %v579 = vld [vmem:[#allocation7 + $0x4c] sm:$0xf]
    %v580 = vld [vmem:[#allocation7 + $0x50] sm:$0xf]
    %v581 = vld [vmem:[#allocation7 + $0x54] sm:$0xf]
    %v582 = vld [vmem:[#allocation7 + $0x58] sm:$0xf]
    %v583 = vld [vmem:[#allocation7 + $0x5c] sm:$0xf]
    %v584 = vld [vmem:[#allocation7 + $0x60] sm:$0xf]
    %v585 = vld [vmem:[#allocation7 + $0x64] sm:$0xf]
    %v586 = vld [vmem:[#allocation7 + $0x68] sm:$0xf]
    %v587 = vld [vmem:[#allocation7 + $0x6c] sm:$0xf]
    %v588 = vld [vmem:[#allocation7 + $0x70] sm:$0xf]
    %v589 = vld [vmem:[#allocation7 + $0x74] sm:$0xf]
    %v590 = vld [vmem:[#allocation7 + $0x78] sm:$0xf]
    %v591 = vld [vmem:[#allocation7 + $0x7c] sm:$0xf]
    %v592 = vld [vmem:[%s4] sm:$0x1]
    %v594 = vlaneseq
    %v595 = vshrl.u32 %v594, 7
    %v596 = vsub.s32 0, %v595
    %v597 = vrot.slane %v592, %v596
    %v631 = vunpack.c.l.b16 %v560
    %v632 = vunpack.c.l.b16 %v561
    %v633 = vunpack.c.l.b16 %v562
    %v634 = vunpack.c.l.b16 %v563
    %v635 = vunpack.c.l.b16 %v564
    %v636 = vunpack.c.l.b16 %v565
    %v637 = vunpack.c.l.b16 %v566
    %v638 = vunpack.c.l.b16 %v567
    %v639 = vunpack.c.l.b16 %v568
    %v640 = vunpack.c.l.b16 %v569
    %v641 = vunpack.c.l.b16 %v570
    %v642 = vunpack.c.l.b16 %v571
    %v643 = vunpack.c.l.b16 %v572
    %v644 = vunpack.c.l.b16 %v573
    %v645 = vunpack.c.l.b16 %v574
    %v646 = vunpack.c.l.b16 %v575
    %v647 = vunpack.c.l.b16 %v576
    %v648 = vunpack.c.l.b16 %v577
    %v649 = vunpack.c.l.b16 %v578
    %v650 = vunpack.c.l.b16 %v579
    %v651 = vunpack.c.l.b16 %v580
    %v652 = vunpack.c.l.b16 %v581
    %v653 = vunpack.c.l.b16 %v582
    %v654 = vunpack.c.l.b16 %v583
    %v655 = vunpack.c.l.b16 %v584
    %v656 = vunpack.c.l.b16 %v585
    %v657 = vunpack.c.l.b16 %v586
    %v658 = vunpack.c.l.b16 %v587
    %v659 = vunpack.c.l.b16 %v588
    %v660 = vunpack.c.l.b16 %v589
    %v661 = vunpack.c.l.b16 %v590
    %v662 = vunpack.c.l.b16 %v591
    %v663 = vpack.c.b16 %v632, %v631
    %v664 = vpack.c.b16 %v634, %v633
    %v665 = vpack.c.b16 %v636, %v635
    %v666 = vpack.c.b16 %v638, %v637
    %v667 = vpack.c.b16 %v640, %v639
    %v668 = vpack.c.b16 %v642, %v641
    %v669 = vpack.c.b16 %v644, %v643
    %v670 = vpack.c.b16 %v646, %v645
    %v671 = vpack.c.b16 %v648, %v647
    %v672 = vpack.c.b16 %v650, %v649
    %v673 = vpack.c.b16 %v652, %v651
    %v674 = vpack.c.b16 %v654, %v653
    %v675 = vpack.c.b16 %v656, %v655
    %v676 = vpack.c.b16 %v658, %v657
    %v677 = vpack.c.b16 %v660, %v659
    %v678 = vpack.c.b16 %v662, %v661
    %695 = vmatprep.subr.bf16.mxu0 0
    %696 = vmatpush1.bf16.msra.mxu0 %v670
    %697 = vmatprep.subr.bf16.mxu0 0
    %698 = vmatpush1.bf16.msra.mxu0 %v669
    %699 = vmatprep.subr.bf16.mxu0 0
    %700 = vmatpush1.bf16.msra.mxu0 %v668
    %701 = vmatprep.subr.bf16.mxu0 0
    %702 = vmatpush1.bf16.msra.mxu0 %v667
    %703 = vmatprep.subr.bf16.mxu0 0
    %704 = vmatpush1.bf16.msra.mxu0 %v666
    %705 = vmatprep.subr.bf16.mxu0 0
    %706 = vmatpush1.bf16.msra.mxu0 %v665
    %707 = vmatprep.subr.bf16.mxu0 0
    %708 = vmatpush1.bf16.msra.mxu0 %v664
    %709 = vmatprep.subr.bf16.mxu0 0
    %710 = vmatpush1.bf16.msra.mxu0 %v663
    %711 = vmatprep.subr.bf16.mxu0 0
    %712 = vmatpush2.bf16.msra.mxu0 %v678
    %713 = vmatprep.subr.bf16.mxu0 0
    %714 = vmatpush2.bf16.msra.mxu0 %v677
    %715 = vmatprep.subr.bf16.mxu0 0
    %716 = vmatpush2.bf16.msra.mxu0 %v676
    %717 = vmatprep.subr.bf16.mxu0 0
    %718 = vmatpush2.bf16.msra.mxu0 %v675
    %719 = vmatprep.subr.bf16.mxu0 0
    %720 = vmatpush2.bf16.msra.mxu0 %v674
    %721 = vmatprep.subr.bf16.mxu0 0
    %722 = vmatpush2.bf16.msra.mxu0 %v673
    %723 = vmatprep.subr.bf16.mxu0 0
    %724 = vmatpush2.bf16.msra.mxu0 %v672
    %725 = vmatprep.subr.bf16.mxu0 0
    %726 = vmatpush2.bf16.msra.mxu0 %v671
    %727 = vmatprep.mubr.bf16.mxu0 %v559
    %728 = vmatmul.mubr.bf16.gmra.mxu0 %v558
    %v729 = vpop.f32.mrf.mxu0
    %v730 = vadd.f32 %v597, %v729
    %v731 = vpop.f32.mrf.mxu0
    %v732 = vpop.f32.mrf.mxu0
    %v733 = vpop.f32.mrf.mxu0
    %734 = vdwg.mxu0
    %v735 = vmax.f32 %v730, 0.0
    %v736 = vpack.c.bf16 %v735, %v735
    %v737 = vld [vmem:[%s5] sm:$0xff]
    %v738 = vld [vmem:[%s5 + $0x8] sm:$0xff]
    %v739 = vld [vmem:[%s5 + $0x10] sm:$0xff]
    %v740 = vld [vmem:[%s5 + $0x18] sm:$0xff]
    %v741 = vld [vmem:[%s5 + $0x20] sm:$0xff]
    %v742 = vld [vmem:[%s5 + $0x28] sm:$0xff]
    %v743 = vld [vmem:[%s5 + $0x30] sm:$0xff]
    %v744 = vld [vmem:[%s5 + $0x38] sm:$0xff]
    %v745 = vld [vmem:[%s5 + $0x40] sm:$0xff]
    %v746 = vld [vmem:[%s5 + $0x48] sm:$0xff]
    %v747 = vld [vmem:[%s5 + $0x50] sm:$0xff]
    %v748 = vld [vmem:[%s5 + $0x58] sm:$0xff]
    %v749 = vld [vmem:[%s5 + $0x60] sm:$0xff]
    %v750 = vld [vmem:[%s5 + $0x68] sm:$0xff]
    %v751 = vld [vmem:[%s5 + $0x70] sm:$0xff]
    %v752 = vld [vmem:[%s5 + $0x78] sm:$0xff]
    %v753 = vld [vmem:[%s5 + $0x80] sm:$0xff]
    %v754 = vld [vmem:[%s5 + $0x88] sm:$0xff]
    %v755 = vld [vmem:[%s5 + $0x90] sm:$0xff]
    %v756 = vld [vmem:[%s5 + $0x98] sm:$0xff]
    %v757 = vld [vmem:[%s5 + $0xa0] sm:$0xff]
    %v758 = vld [vmem:[%s5 + $0xa8] sm:$0xff]
    %v759 = vld [vmem:[%s5 + $0xb0] sm:$0xff]
    %v760 = vld [vmem:[%s5 + $0xb8] sm:$0xff]
    %v761 = vld [vmem:[%s5 + $0xc0] sm:$0xff]
    %v762 = vld [vmem:[%s5 + $0xc8] sm:$0xff]
    %v763 = vld [vmem:[%s5 + $0xd0] sm:$0xff]
    %v764 = vld [vmem:[%s5 + $0xd8] sm:$0xff]
    %v765 = vld [vmem:[%s5 + $0xe0] sm:$0xff]
    %v766 = vld [vmem:[%s5 + $0xe8] sm:$0xff]
    %v767 = vld [vmem:[%s5 + $0xf0] sm:$0xff]
    %v768 = vld [vmem:[%s5 + $0xf8] sm:$0xff]
    %v769 = vld [vmem:[%s6] sm:$0xf]
    %v771 = vlaneseq
    %v772 = vshrl.u32 %v771, 7
    %v773 = vsub.s32 0, %v772
    %v774 = vrot.slane %v769, %v773
    %v775 = vlaneseq
    %v776 = vshrl.u32 %v775, 7
    %v777 = vsub.s32 1, %v776
    %v778 = vrot.slane %v769, %v777
    %v779 = vlaneseq
    %v780 = vshrl.u32 %v779, 7
    %v781 = vsub.s32 2, %v780
    %v782 = vrot.slane %v769, %v781
    %v783 = vlaneseq
    %v784 = vshrl.u32 %v783, 7
    %v785 = vsub.s32 3, %v784
    %v786 = vrot.slane %v769, %v785
    %v823 = vunpack.c.l.b16 %v737
    %v824 = vunpack.c.h.b16 %v737
    %v825 = vunpack.c.l.b16 %v738
    %v826 = vunpack.c.h.b16 %v738
    %v827 = vunpack.c.l.b16 %v739
    %v828 = vunpack.c.h.b16 %v739
    %v829 = vunpack.c.l.b16 %v740
    %v830 = vunpack.c.h.b16 %v740
    %v831 = vunpack.c.l.b16 %v741
    %v832 = vunpack.c.h.b16 %v741
    %v833 = vunpack.c.l.b16 %v742
    %v834 = vunpack.c.h.b16 %v742
    %v835 = vunpack.c.l.b16 %v743
    %v836 = vunpack.c.h.b16 %v743
    %v837 = vunpack.c.l.b16 %v744
    %v838 = vunpack.c.h.b16 %v744
    %v839 = vunpack.c.l.b16 %v745
    %v840 = vunpack.c.h.b16 %v745
    %v841 = vunpack.c.l.b16 %v746
    %v842 = vunpack.c.h.b16 %v746
    %v843 = vunpack.c.l.b16 %v747
    %v844 = vunpack.c.h.b16 %v747
    %v845 = vunpack.c.l.b16 %v748
    %v846 = vunpack.c.h.b16 %v748
    %v847 = vunpack.c.l.b16 %v749
    %v848 = vunpack.c.h.b16 %v749
    %v849 = vunpack.c.l.b16 %v750
    %v850 = vunpack.c.h.b16 %v750
    %v851 = vunpack.c.l.b16 %v751
    %v852 = vunpack.c.h.b16 %v751
    %v853 = vunpack.c.l.b16 %v752
    %v854 = vunpack.c.h.b16 %v752
    %v855 = vunpack.c.l.b16 %v753
    %v856 = vunpack.c.h.b16 %v753
    %v857 = vunpack.c.l.b16 %v754
    %v858 = vunpack.c.h.b16 %v754
    %v859 = vunpack.c.l.b16 %v755
    %v860 = vunpack.c.h.b16 %v755
    %v861 = vunpack.c.l.b16 %v756
    %v862 = vunpack.c.h.b16 %v756
    %v863 = vunpack.c.l.b16 %v757
    %v864 = vunpack.c.h.b16 %v757
    %v865 = vunpack.c.l.b16 %v758
    %v866 = vunpack.c.h.b16 %v758
    %v867 = vunpack.c.l.b16 %v759
    %v868 = vunpack.c.h.b16 %v759
    %v869 = vunpack.c.l.b16 %v760
    %v870 = vunpack.c.h.b16 %v760
    %v871 = vunpack.c.l.b16 %v761
    %v872 = vunpack.c.h.b16 %v761
    %v873 = vunpack.c.l.b16 %v762
    %v874 = vunpack.c.h.b16 %v762
    %v875 = vunpack.c.l.b16 %v763
    %v876 = vunpack.c.h.b16 %v763
    %v877 = vunpack.c.l.b16 %v764
    %v878 = vunpack.c.h.b16 %v764
    %v879 = vunpack.c.l.b16 %v765
    %v880 = vunpack.c.h.b16 %v765
    %v881 = vunpack.c.l.b16 %v766
    %v882 = vunpack.c.h.b16 %v766
    %v883 = vunpack.c.l.b16 %v767
    %v884 = vunpack.c.h.b16 %v767
    %v885 = vunpack.c.l.b16 %v768
    %v886 = vunpack.c.h.b16 %v768
    %v887 = vpack.c.b16 %v827, %v823
    %v888 = vpack.c.b16 %v828, %v824
    %v889 = vpack.c.b16 %v829, %v825
    %v890 = vpack.c.b16 %v830, %v826
    %v891 = vpack.c.b16 %v835, %v831
    %v892 = vpack.c.b16 %v836, %v832
    %v893 = vpack.c.b16 %v837, %v833
    %v894 = vpack.c.b16 %v838, %v834
    %v895 = vpack.c.b16 %v843, %v839
    %v896 = vpack.c.b16 %v844, %v840
    %v897 = vpack.c.b16 %v845, %v841
    %v898 = vpack.c.b16 %v846, %v842
    %v899 = vpack.c.b16 %v851, %v847
    %v900 = vpack.c.b16 %v852, %v848
    %v901 = vpack.c.b16 %v853, %v849
    %v902 = vpack.c.b16 %v854, %v850
    %v903 = vpack.c.b16 %v859, %v855
    %v904 = vpack.c.b16 %v860, %v856
    %v905 = vpack.c.b16 %v861, %v857
    %v906 = vpack.c.b16 %v862, %v858
    %v907 = vpack.c.b16 %v867, %v863
    %v908 = vpack.c.b16 %v868, %v864
    %v909 = vpack.c.b16 %v869, %v865
    %v910 = vpack.c.b16 %v870, %v866
    %v911 = vpack.c.b16 %v875, %v871
    %v912 = vpack.c.b16 %v876, %v872
    %v913 = vpack.c.b16 %v877, %v873
    %v914 = vpack.c.b16 %v878, %v874
    %v915 = vpack.c.b16 %v883, %v879
    %v916 = vpack.c.b16 %v884, %v880
    %v917 = vpack.c.b16 %v885, %v881
    %v918 = vpack.c.b16 %v886, %v882
    %951 = vmatprep.subr.bf16.mxu0 %v916
    %952 = vmatpush1.bf16.msra.mxu0 %v915
    %953 = vmatprep.subr.bf16.mxu0 %v912
    %954 = vmatpush1.bf16.msra.mxu0 %v911
    %955 = vmatprep.subr.bf16.mxu0 %v908
    %956 = vmatpush1.bf16.msra.mxu0 %v907
    %957 = vmatprep.subr.bf16.mxu0 %v904
    %958 = vmatpush1.bf16.msra.mxu0 %v903
    %959 = vmatprep.subr.bf16.mxu0 %v900
    %960 = vmatpush1.bf16.msra.mxu0 %v899
    %961 = vmatprep.subr.bf16.mxu0 %v896
    %962 = vmatpush1.bf16.msra.mxu0 %v895
    %963 = vmatprep.subr.bf16.mxu0 %v892
    %964 = vmatpush1.bf16.msra.mxu0 %v891
    %965 = vmatprep.subr.bf16.mxu0 %v888
    %966 = vmatpush1.bf16.msra.mxu0 %v887
    %967 = vmatprep.subr.bf16.mxu0 0
    %968 = vmatpush2.bf16.msra.mxu0 0
    %969 = vmatprep.subr.bf16.mxu0 0
    %970 = vmatpush2.bf16.msra.mxu0 0
    %971 = vmatprep.subr.bf16.mxu0 0
    %972 = vmatpush2.bf16.msra.mxu0 0
    %973 = vmatprep.subr.bf16.mxu0 0
    %974 = vmatpush2.bf16.msra.mxu0 0
    %975 = vmatprep.subr.bf16.mxu0 0
    %976 = vmatpush2.bf16.msra.mxu0 0
    %977 = vmatprep.subr.bf16.mxu0 0
    %978 = vmatpush2.bf16.msra.mxu0 0
    %979 = vmatprep.subr.bf16.mxu0 0
    %980 = vmatpush2.bf16.msra.mxu0 0
    %981 = vmatprep.subr.bf16.mxu0 0
    %982 = vmatpush2.bf16.msra.mxu0 0
    %983 = vmatprep.mubr.bf16.mxu0 0
    %984 = vmatmul.mubr.bf16.gmra.mxu0 %v736
    %v985 = vpop.f32.mrf.mxu0
    %v986 = vadd.f32 %v774, %v985
    %v987 = vpop.f32.mrf.mxu0
    %v988 = vadd.f32 %v778, %v987
    %v989 = vpop.f32.mrf.mxu0
    %v990 = vpop.f32.mrf.mxu0
    %991 = vdwg.mxu0
    %992 = vmatprep.subr.bf16.mxu0 %v918
    %993 = vmatpush1.bf16.msra.mxu0 %v917
    %994 = vmatprep.subr.bf16.mxu0 %v914
    %995 = vmatpush1.bf16.msra.mxu0 %v913
    %996 = vmatprep.subr.bf16.mxu0 %v910
    %997 = vmatpush1.bf16.msra.mxu0 %v909
    %998 = vmatprep.subr.bf16.mxu0 %v906
    %999 = vmatpush1.bf16.msra.mxu0 %v905
    %1000 = vmatprep.subr.bf16.mxu0 %v902
    %1001 = vmatpush1.bf16.msra.mxu0 %v901
    %1002 = vmatprep.subr.bf16.mxu0 %v898
    %1003 = vmatpush1.bf16.msra.mxu0 %v897
    %1004 = vmatprep.subr.bf16.mxu0 %v894
    %1005 = vmatpush1.bf16.msra.mxu0 %v893
    %1006 = vmatprep.subr.bf16.mxu0 %v890
    %1007 = vmatpush1.bf16.msra.mxu0 %v889
    %1008 = vmatprep.subr.bf16.mxu0 0
    %1009 = vmatpush2.bf16.msra.mxu0 0
    %1010 = vmatprep.subr.bf16.mxu0 0
    %1011 = vmatpush2.bf16.msra.mxu0 0
    %1012 = vmatprep.subr.bf16.mxu0 0
    %1013 = vmatpush2.bf16.msra.mxu0 0
    %1014 = vmatprep.subr.bf16.mxu0 0
    %1015 = vmatpush2.bf16.msra.mxu0 0
    %1016 = vmatprep.subr.bf16.mxu0 0
    %1017 = vmatpush2.bf16.msra.mxu0 0
    %1018 = vmatprep.subr.bf16.mxu0 0
    %1019 = vmatpush2.bf16.msra.mxu0 0
    %1020 = vmatprep.subr.bf16.mxu0 0
    %1021 = vmatpush2.bf16.msra.mxu0 0
    %1022 = vmatprep.subr.bf16.mxu0 0
    %1023 = vmatpush2.bf16.msra.mxu0 0
    %1024 = vmatprep.mubr.bf16.mxu0 0
    %1025 = vmatmul.mubr.bf16.gmra.mxu0 %v736
    %v1026 = vpop.f32.mrf.mxu0
    %v1027 = vadd.f32 %v782, %v1026
    %v1028 = vpop.f32.mrf.mxu0
    %v1029 = vadd.f32 %v786, %v1028
    %v1030 = vpop.f32.mrf.mxu0
    %v1031 = vpop.f32.mrf.mxu0
    %1032 = vdwg.mxu0
    %v1033 = vxor.u32 %v986, 2147483648
    %v1034 = vxor.u32 %v988, 2147483648
    %v1035 = vxor.u32 %v1027, 2147483648
    %v1036 = vxor.u32 %v1029, 2147483648
    %v1037 = vmul.f32 %v1033, 1.442695
    %v1038 = vpow.pop %v1037
    %v1039 = vmul.f32 %v1034, 1.442695
    %v1040 = vpow.pop %v1039
    %v1041 = vmul.f32 %v1035, 1.442695
    %v1042 = vpow.pop %v1041
    %v1043 = vmul.f32 %v1036, 1.442695
    %v1044 = vpow.pop %v1043
    %v1045 = vadd.f32 %v1038, 1.0
    %v1046 = vadd.f32 %v1040, 1.0
    %v1047 = vadd.f32 %v1042, 1.0
    %v1048 = vadd.f32 %v1044, 1.0
    %v1049 = vrcp.pop %v1045
    %v1050 = vmul.f32 1.0, %v1049
    %v1051 = vrcp.pop %v1046
    %v1052 = vmul.f32 1.0, %v1051
    %v1053 = vrcp.pop %v1047
    %v1054 = vmul.f32 1.0, %v1053
    %v1055 = vrcp.pop %v1048
    %v1056 = vmul.f32 1.0, %v1055
    %1057 = vst [vmem:[#allocation8] sm:$0xff] %v1050
    %1058 = vst [vmem:[#allocation8 + $0x8] sm:$0xff] %v1052
    %1059 = vst [vmem:[#allocation8 + $0x10] sm:$0xff] %v1054
    %1060 = vst.msk [vmem:[#allocation8 + $0x18] sm:$0xff] %vm463, %v1056
    // Predicated region
    $region42: #{tpu_custom_call.1} parent=1 // pred_check
      _
    $region43: #{tpu_custom_call.1} parent=1 // pred_check_branch
      %1062 = sbr.rel (0) target = $region45
    $region44: #{tpu_custom_call.1} parent=1 // pred_region
      %s1064 = ssub.s32 512, 512
      %1065 = vsyncadd [#allocation4], %s1064
      %s1067 = sshll.u32 [#allocation8], 4
      %s1068 = int_to_ptr.vmem [resolvable:$true] %s1067
      %1070 = dma.vmem_to_hbm [thread:$0]  %s1068, 512, %s7, [#allocation4]
    $region45: #{tpu_custom_call.1} parent=1 // pred_fallthru
      _
    // Predicated region
    $region46: #{tpu_custom_call.1} parent=1 // pred_check
      _
    $region47: #{tpu_custom_call.1} parent=1 // pred_check_branch
      %1072 = sbr.rel (0) target = $region49
    $region48: #{tpu_custom_call.1} parent=1 // pred_region
      %1073 = dma.done [#allocation4], 512
    $region49: #{tpu_custom_call.1} parent=1 // pred_fallthru
      _
    %1074 = vsyncpa [#allocation3], 1
    %1075 = vsyncpa [#allocation6], 1
    %1076 = vsyncpa [#allocation4], 1

</llo_original>
